<compile_context>
chip_gen: v6e
topology: v6e:2x2x1
jax: 0.10.0
libtpu: 0.0.40
codegen_flags: <defaults>
</compile_context>

<pallas_src>
import numpy as np
import jax
import jax.numpy as jnp
from jax.experimental import pallas as pl
from jax.experimental.pallas import tpu as pltpu

INPUT_LENGTH = 16   # after 3x /2 maxpools and pool4(stride=2) the length is 1 -> fc1(128) fits
NUM_CLASSES = 10
OUT_PAD = 128       # logits padded to a lane-dense 128-wide output slab


# ----------------------------------------------------------------------------- kernel
def _cnn_kernel(x_ref, w1_ref, wc_ref, w4_ref, wf2_ref, bc_ref, bf1_ref, out_ref):
    """One batch tile: x_ref (Bt, 17) -> out_ref (Bt, 128) padded logits."""
    mmdt = w1_ref.dtype   # matmul operand dtype (bf16 fast path or f32 exact path)

    def pool_relu(y, brow):
        # maxpool(relu(conv + b)) == relu(max(even, odd) + b)   (relu and +b are monotone)
        return jnp.maximum(jnp.maximum(y[:, :128], y[:, 128:]) + brow, 0.0)

    # conv1 + ReLU + pool1 -- conv1 bias is folded into w1's last row (x has a ones column).
    y1 = jnp.dot(x_ref[...].astype(mmdt), w1_ref[...], preferred_element_type=jnp.float32)
    p1 = jnp.maximum(jnp.maximum(y1[:, :128], y1[:, 128:]), 0.0)            # (Bt, 8*16)

    # conv2 + ReLU + pool2
    y2 = jnp.dot(p1.astype(mmdt), wc_ref[0], preferred_element_type=jnp.float32)
    p2 = pool_relu(y2, bc_ref[0])                                           # (Bt, 4*32)

    # conv3 + ReLU + pool3
    y3 = jnp.dot(p2.astype(mmdt), wc_ref[1], preferred_element_type=jnp.float32)
    p3 = pool_relu(y3, bc_ref[1])                                           # (Bt, 2*64)

    # conv4 + ReLU; pool4(k=1, s=2) keeps only output position 0 -> w4 is dense (128,128).
    y4 = jnp.dot(p3.astype(mmdt), w4_ref[...], preferred_element_type=jnp.float32)
    f = jnp.maximum(y4 + bc_ref[2], 0.0)                                    # (Bt, 128) == flatten

    # fc1 + ReLU, fc2 (output padded to 128 lanes for unmasked stores).
    h = jnp.maximum(
        jnp.dot(f.astype(mmdt), wc_ref[2], preferred_element_type=jnp.float32) + bf1_ref[...],
        0.0)                                                                # (Bt, 256)
    out = jnp.dot(h.astype(mmdt), wf2_ref[...], preferred_element_type=jnp.float32) + bc_ref[3]
    out_ref[...] = out.astype(out_ref.dtype)


# ---------------------------------------------------------------------- weight packing
def _conv_as_dense(w, l_in, positions):
    """Conv1d(k=3, s=1, p=1) weights (torch (Cout, Cin, 3)) -> dense matrix mapping the
    flat position-major (l_in*Cin) input layout to the conv outputs at `positions`
    (columns ordered j*Cout + c_out)."""
    cout, cin, _ = w.shape
    W = jnp.zeros((l_in * cin, len(positions) * cout), jnp.float32)
    for j, lo in enumerate(positions):
        for k in range(3):
            p = lo + k - 1                      # padding=1: input position for tap k
            if 0 <= p < l_in:
                W = W.at[p * cin:(p + 1) * cin, j * cout:(j + 1) * cout].set(w[:, :, k].T)
    return W


def _pack_params(params, num_classes, mm_dtype):
    # conv1: even|odd column halves + bias row (bias folded into the matmul).
    w1 = jnp.concatenate(
        [_conv_as_dense(params["conv1_w"], 16, range(0, 16, 2)),
         _conv_as_dense(params["conv1_w"], 16, range(1, 16, 2))], axis=1)   # (16, 256)
    w1 = jnp.concatenate([w1, jnp.tile(params["conv1_b"], 16)[None, :]], axis=0)  # (17, 256)

    w2 = jnp.concatenate(
        [_conv_as_dense(params["conv2_w"], 8, range(0, 8, 2)),
         _conv_as_dense(params["conv2_w"], 8, range(1, 8, 2))], axis=1)     # (128, 256)
    w3 = jnp.concatenate(
        [_conv_as_dense(params["conv3_w"], 4, range(0, 4, 2)),
         _conv_as_dense(params["conv3_w"], 4, range(1, 4, 2))], axis=1)     # (128, 256)
    w4 = _conv_as_dense(params["conv4_w"], 2, [0])                          # (128, 128), no zeros
    wc = jnp.stack([w2, w3, params["fc1_w"].T.astype(jnp.float32)])         # (3, 128, 256)

    wf2 = jnp.zeros((256, OUT_PAD), jnp.float32).at[:, :num_classes].set(params["fc2_w"].T)

    bc = jnp.stack([
        jnp.tile(params["conv2_b"], 4),
        jnp.tile(params["conv3_b"], 2),
        params["conv4_b"],
        jnp.zeros((OUT_PAD,), jnp.float32).at[:num_classes].set(params["fc2_b"]),
    ]).astype(jnp.float32)[:, None, :]                                      # (4, 1, 128)
    bf1 = params["fc1_b"][None, :].astype(jnp.float32)                      # (1, 256)

    cast = lambda a: a.astype(mm_dtype)   # matmul operands in mm_dtype; biases stay f32
    return cast(w1), cast(wc), cast(w4), cast(wf2), bc, bf1


# ------------------------------------------------------------------------- tile choice
def _choose_batch_tile(B, batch_tile):
    """Batch tile: multiple of 8, large enough to amortize per-step overhead, and
    >=2 grid steps whenever the batch allows it (v7x has 2 TCs; neutral elsewhere)."""
    b8 = -(-max(B, 1) // 8) * 8                                  # batch rounded up to 8
    n = max(-(-b8 // min(batch_tile, b8)), 2 if b8 >= 16 else 1) # desired grid steps
    return -(-b8 // (8 * n)) * 8


# ---------------------------------------------------------------------------- wrapper
def cnn1d_forward(x_ncl, params, num_classes=NUM_CLASSES, batch_tile=512,
                  mm_dtype=jnp.bfloat16):
    """x_ncl: (B, 1, L) float32 in PyTorch NCL layout.  Returns (B, num_classes).

    mm_dtype: dtype of the matmul operands (weights + inter-stage activations).
    bfloat16 is the fast MXU path on all generations; float32 is bit-faithful."""
    B, cin, L = x_ncl.shape
    assert cin == 1 and L == INPUT_LENGTH and num_classes <= OUT_PAD

    w1, wc, w4, wf2, bc, bf1 = _pack_params(params, num_classes, mm_dtype)

    bt = _choose_batch_tile(B, batch_tile)
    Bp = -(-B // bt) * bt
    x = x_ncl[:, 0, :].astype(jnp.float32)                      # (B, L): Cin == 1
    x = jnp.concatenate([x, jnp.ones((B, 1), jnp.float32)], axis=1)  # ones column (conv1 bias)
    x = jnp.pad(x, ((0, Bp - B), (0, 0)))                        # pad batch to a tile multiple

    out = pl.pallas_call(
        _cnn_kernel,
        out_shape=jax.ShapeDtypeStruct((Bp, OUT_PAD), jnp.float32),
        grid=(Bp // bt,),
        in_specs=[
            pl.BlockSpec((bt, L + 1), lambda i: (i, 0)),           # x batch tile (+ ones col)
            pl.BlockSpec((L + 1, 256), lambda i: (0, 0)),          # conv1 even|odd + bias row
            pl.BlockSpec((3, 128, 256), lambda i: (0, 0, 0)),      # conv2, conv3, fc1
            pl.BlockSpec((128, 128), lambda i: (0, 0)),            # conv4 (position 0 only)
            pl.BlockSpec((256, OUT_PAD), lambda i: (0, 0)),        # fc2 (padded)
            pl.BlockSpec((4, 1, OUT_PAD), lambda i: (0, 0, 0)),    # 128-wide biases
            pl.BlockSpec((1, 256), lambda i: (0, 0)),              # fc1 bias
        ],
        out_specs=pl.BlockSpec((bt, OUT_PAD), lambda i: (i, 0)),
        compiler_params=pltpu.CompilerParams(dimension_semantics=("parallel",)),
    )(x, w1, wc, w4, wf2, bc, bf1)
    return out[:B, :num_classes]


# ------------------------------------------------------------------ init & reference
def init_params(key, num_classes):
    """Deterministic init, PyTorch-style U(-1/sqrt(fan_in), 1/sqrt(fan_in)), torch layouts."""
    ks = jax.random.split(key, 12)

    def u(k, shape, fan_in):
        bound = 1.0 / np.sqrt(fan_in)
        return jax.random.uniform(k, shape, jnp.float32, -bound, bound)

    p = {}
    convs = [(1, 16), (16, 32), (32, 64), (64, 128)]
    i = 0
    for n, (cin, cout) in enumerate(convs, start=1):
        p[f"conv{n}_w"] = u(ks[i], (cout, cin, 3), cin * 3); i += 1
        p[f"conv{n}_b"] = u(ks[i], (cout,), cin * 3); i += 1
    p["fc1_w"] = u(ks[i], (256, 128), 128); i += 1
    p["fc1_b"] = u(ks[i], (256,), 128); i += 1
    p["fc2_w"] = u(ks[i], (num_classes, 256), 256); i += 1
    p["fc2_b"] = u(ks[i], (num_classes,), 256); i += 1
    return p


def reference_forward(x_ncl, params):
    """Pure-JAX/XLA reference matching the PyTorch forward exactly."""
    def conv1d(x, w, b):
        y = jax.lax.conv_general_dilated(
            x, w, window_strides=(1,), padding=((1, 1),),
            dimension_numbers=("NCH", "OIH", "NCH"))
        return y + b[None, :, None]

    def maxpool(x, k, s):
        return jax.lax.reduce_window(
            x, -jnp.inf, jax.lax.max,
            window_dimensions=(1, 1, k), window_strides=(1, 1, s), padding="VALID")

    h = maxpool(jax.nn.relu(conv1d(x_ncl, params["conv1_w"], params["conv1_b"])), 2, 2)
    h = maxpool(jax.nn.relu(conv1d(h, params["conv2_w"], params["conv2_b"])), 2, 2)
    h = maxpool(jax.nn.relu(conv1d(h, params["conv3_w"], params["conv3_b"])), 2, 2)
    h = maxpool(jax.nn.relu(conv1d(h, params["conv4_w"], params["conv4_b"])), 1, 2)
    B = h.shape[0]
    f = h.reshape(B, -1)                                   # x.view(-1, 128 * x.shape[2])
    f = jax.nn.relu(f @ params["fc1_w"].T + params["fc1_b"])
    return f @ params["fc2_w"].T + params["fc2_b"]


if __name__ == "__main__":
    key = jax.random.PRNGKey(0)
    pkey, xkey = jax.random.split(key)
    params = init_params(pkey, NUM_CLASSES)

    # (B, C=1, L) -- PyTorch NCL input layout
    x = jax.random.normal(xkey, (2, 1, INPUT_LENGTH), jnp.float32)
    ref = reference_forward(x, params)

    # Exact-semantics path: f32 matmul operands, tight tolerance.
    out_f32 = jax.block_until_ready(cnn1d_forward(x, params, mm_dtype=jnp.float32))
    err_f32 = np.max(np.abs(np.asarray(out_f32) - np.asarray(ref)))
    if not np.allclose(np.asarray(out_f32), np.asarray(ref), atol=2e-3, rtol=2e-3):
        raise AssertionError(f"Pallas f32 kernel mismatch vs reference, max abs err = {err_f32}")

    # Fast path (default): bf16 matmul operands, f32 accumulation and elementwise math.
    out_bf16 = jax.block_until_ready(cnn1d_forward(x, params))
    err_bf16 = np.max(np.abs(np.asarray(out_bf16) - np.asarray(ref)))
    if not np.allclose(np.asarray(out_bf16), np.asarray(ref), atol=3e-2, rtol=3e-2):
        raise AssertionError(f"Pallas bf16 kernel mismatch vs reference, max abs err = {err_bf16}")

    print("KERNEL_OK")
</pallas_src>

<mosaic_0001>
module attributes {stable_mosaic.version = 11 : i64} {
  func.func @_cnn_kernel(%arg0: i32, %arg1: memref<8x17xf32, #tpu.memory_space<vmem>>, %arg2: memref<17x256xf32, #tpu.memory_space<vmem>>, %arg3: memref<3x128x256xf32, #tpu.memory_space<vmem>>, %arg4: memref<128x128xf32, #tpu.memory_space<vmem>>, %arg5: memref<256x128xf32, #tpu.memory_space<vmem>>, %arg6: memref<4x1x128xf32, #tpu.memory_space<vmem>>, %arg7: memref<1x256xf32, #tpu.memory_space<vmem>>, %arg8: memref<8x128xf32, #tpu.memory_space<vmem>>) attributes {dimension_semantics = [#tpu.dimension_semantics<parallel>], iteration_bounds = array<i64: 1>, scalar_prefetch = 0 : i64, scratch_operands = 0 : i64, tpu.core_type = #tpu.core_type<tc>, window_params = [{transform_indices = @transform_0, window_bounds = array<i64: 8, 17>}, {pipeline_mode = #tpu.pipeline_mode<synchronous>, transform_indices = @transform_1, window_bounds = array<i64: 17, 256>}, {pipeline_mode = #tpu.pipeline_mode<synchronous>, transform_indices = @transform_2, window_bounds = array<i64: 3, 128, 256>}, {pipeline_mode = #tpu.pipeline_mode<synchronous>, transform_indices = @transform_3, window_bounds = array<i64: 128, 128>}, {pipeline_mode = #tpu.pipeline_mode<synchronous>, transform_indices = @transform_4, window_bounds = array<i64: 256, 128>}, {pipeline_mode = #tpu.pipeline_mode<synchronous>, transform_indices = @transform_5, window_bounds = array<i64: 4, 1, 128>}, {pipeline_mode = #tpu.pipeline_mode<synchronous>, transform_indices = @transform_6, window_bounds = array<i64: 1, 256>}, {transform_indices = @transform_7, window_bounds = array<i64: 8, 128>}]} {
    %c0 = arith.constant 0 : index
    %c0_0 = arith.constant 0 : index
    %0 = vector.load %arg1[%c0, %c0_0] : memref<8x17xf32, #tpu.memory_space<vmem>>, vector<8x17xf32>
    %c0_1 = arith.constant 0 : index
    %c0_2 = arith.constant 0 : index
    %1 = vector.load %arg2[%c0_1, %c0_2] : memref<17x256xf32, #tpu.memory_space<vmem>>, vector<17x256xf32>
    %cst = arith.constant dense<0.000000e+00> : vector<8x256xf32>
    %2 = tpu.matmul %0, %1, %cst {dimension_numbers = #tpu.dot_dimension_numbers<[1], [0], [0], [1], [0, 0, 1, 1], [], []>} : vector<8x17xf32>, vector<17x256xf32>, vector<8x256xf32> -> vector<8x256xf32>
    %3 = vector.extract_strided_slice %2 {offsets = [0, 0], sizes = [8, 128], strides = [1, 1]} : vector<8x256xf32> to vector<8x128xf32>
    %4 = vector.extract_strided_slice %2 {offsets = [0, 128], sizes = [8, 128], strides = [1, 1]} : vector<8x256xf32> to vector<8x128xf32>
    %5 = arith.maximumf %3, %4 : vector<8x128xf32>
    %cst_3 = arith.constant 0.000000e+00 : f32
    %6 = vector.broadcast %cst_3 : f32 to vector<8x128xf32>
    %7 = arith.maximumf %5, %6 : vector<8x128xf32>
    %c0_4 = arith.constant 0 : index
    %c0_5 = arith.constant 0 : index
    %c0_6 = arith.constant 0 : index
    %8 = vector.load %arg3[%c0_4, %c0_5, %c0_6] : memref<3x128x256xf32, #tpu.memory_space<vmem>>, vector<1x128x256xf32>
    %9 = vector.shape_cast %8 : vector<1x128x256xf32> to vector<128x256xf32>
    %cst_7 = arith.constant dense<0.000000e+00> : vector<8x256xf32>
    %10 = tpu.matmul %7, %9, %cst_7 {dimension_numbers = #tpu.dot_dimension_numbers<[1], [0], [0], [1], [0, 0, 1, 1], [], []>} : vector<8x128xf32>, vector<128x256xf32>, vector<8x256xf32> -> vector<8x256xf32>
    %c0_8 = arith.constant 0 : index
    %c0_9 = arith.constant 0 : index
    %c0_10 = arith.constant 0 : index
    %11 = vector.load %arg6[%c0_8, %c0_9, %c0_10] : memref<4x1x128xf32, #tpu.memory_space<vmem>>, vector<1x1x128xf32>
    %12 = vector.shape_cast %11 : vector<1x1x128xf32> to vector<1x128xf32>
    %13 = vector.extract_strided_slice %10 {offsets = [0, 0], sizes = [8, 128], strides = [1, 1]} : vector<8x256xf32> to vector<8x128xf32>
    %14 = vector.extract_strided_slice %10 {offsets = [0, 128], sizes = [8, 128], strides = [1, 1]} : vector<8x256xf32> to vector<8x128xf32>
    %15 = arith.maximumf %13, %14 : vector<8x128xf32>
    %16 = vector.broadcast %12 : vector<1x128xf32> to vector<8x128xf32>
    %17 = arith.addf %15, %16 : vector<8x128xf32>
    %cst_11 = arith.constant 0.000000e+00 : f32
    %18 = vector.broadcast %cst_11 : f32 to vector<8x128xf32>
    %19 = arith.maximumf %17, %18 : vector<8x128xf32>
    %c1 = arith.constant 1 : index
    %c0_12 = arith.constant 0 : index
    %c0_13 = arith.constant 0 : index
    %20 = vector.load %arg3[%c1, %c0_12, %c0_13] : memref<3x128x256xf32, #tpu.memory_space<vmem>>, vector<1x128x256xf32>
    %21 = vector.shape_cast %20 : vector<1x128x256xf32> to vector<128x256xf32>
    %cst_14 = arith.constant dense<0.000000e+00> : vector<8x256xf32>
    %22 = tpu.matmul %19, %21, %cst_14 {dimension_numbers = #tpu.dot_dimension_numbers<[1], [0], [0], [1], [0, 0, 1, 1], [], []>} : vector<8x128xf32>, vector<128x256xf32>, vector<8x256xf32> -> vector<8x256xf32>
    %c1_15 = arith.constant 1 : index
    %c0_16 = arith.constant 0 : index
    %c0_17 = arith.constant 0 : index
    %23 = vector.load %arg6[%c1_15, %c0_16, %c0_17] : memref<4x1x128xf32, #tpu.memory_space<vmem>>, vector<1x1x128xf32>
    %24 = vector.shape_cast %23 : vector<1x1x128xf32> to vector<1x128xf32>
    %25 = vector.extract_strided_slice %22 {offsets = [0, 0], sizes = [8, 128], strides = [1, 1]} : vector<8x256xf32> to vector<8x128xf32>
    %26 = vector.extract_strided_slice %22 {offsets = [0, 128], sizes = [8, 128], strides = [1, 1]} : vector<8x256xf32> to vector<8x128xf32>
    %27 = arith.maximumf %25, %26 : vector<8x128xf32>
    %28 = vector.broadcast %24 : vector<1x128xf32> to vector<8x128xf32>
    %29 = arith.addf %27, %28 : vector<8x128xf32>
    %cst_18 = arith.constant 0.000000e+00 : f32
    %30 = vector.broadcast %cst_18 : f32 to vector<8x128xf32>
    %31 = arith.maximumf %29, %30 : vector<8x128xf32>
    %c0_19 = arith.constant 0 : index
    %c0_20 = arith.constant 0 : index
    %32 = vector.load %arg4[%c0_19, %c0_20] : memref<128x128xf32, #tpu.memory_space<vmem>>, vector<128x128xf32>
    %cst_21 = arith.constant dense<0.000000e+00> : vector<8x128xf32>
    %33 = tpu.matmul %31, %32, %cst_21 {dimension_numbers = #tpu.dot_dimension_numbers<[1], [0], [0], [1], [0, 0, 1, 1], [], []>} : vector<8x128xf32>, vector<128x128xf32>, vector<8x128xf32> -> vector<8x128xf32>
    %c2 = arith.constant 2 : index
    %c0_22 = arith.constant 0 : index
    %c0_23 = arith.constant 0 : index
    %34 = vector.load %arg6[%c2, %c0_22, %c0_23] : memref<4x1x128xf32, #tpu.memory_space<vmem>>, vector<1x1x128xf32>
    %35 = vector.shape_cast %34 : vector<1x1x128xf32> to vector<1x128xf32>
    %36 = vector.broadcast %35 : vector<1x128xf32> to vector<8x128xf32>
    %37 = arith.addf %33, %36 : vector<8x128xf32>
    %cst_24 = arith.constant 0.000000e+00 : f32
    %38 = vector.broadcast %cst_24 : f32 to vector<8x128xf32>
    %39 = arith.maximumf %37, %38 : vector<8x128xf32>
    %c2_25 = arith.constant 2 : index
    %c0_26 = arith.constant 0 : index
    %c0_27 = arith.constant 0 : index
    %40 = vector.load %arg3[%c2_25, %c0_26, %c0_27] : memref<3x128x256xf32, #tpu.memory_space<vmem>>, vector<1x128x256xf32>
    %41 = vector.shape_cast %40 : vector<1x128x256xf32> to vector<128x256xf32>
    %cst_28 = arith.constant dense<0.000000e+00> : vector<8x256xf32>
    %42 = tpu.matmul %39, %41, %cst_28 {dimension_numbers = #tpu.dot_dimension_numbers<[1], [0], [0], [1], [0, 0, 1, 1], [], []>} : vector<8x128xf32>, vector<128x256xf32>, vector<8x256xf32> -> vector<8x256xf32>
    %c0_29 = arith.constant 0 : index
    %c0_30 = arith.constant 0 : index
    %43 = vector.load %arg7[%c0_29, %c0_30] : memref<1x256xf32, #tpu.memory_space<vmem>>, vector<1x256xf32>
    %44 = vector.broadcast %43 : vector<1x256xf32> to vector<8x256xf32>
    %45 = arith.addf %42, %44 : vector<8x256xf32>
    %cst_31 = arith.constant 0.000000e+00 : f32
    %46 = vector.broadcast %cst_31 : f32 to vector<8x256xf32>
    %47 = arith.maximumf %45, %46 : vector<8x256xf32>
    %c0_32 = arith.constant 0 : index
    %c0_33 = arith.constant 0 : index
    %48 = vector.load %arg5[%c0_32, %c0_33] : memref<256x128xf32, #tpu.memory_space<vmem>>, vector<256x128xf32>
    %cst_34 = arith.constant dense<0.000000e+00> : vector<8x128xf32>
    %49 = tpu.matmul %47, %48, %cst_34 {dimension_numbers = #tpu.dot_dimension_numbers<[1], [0], [0], [1], [0, 0, 1, 1], [], []>} : vector<8x256xf32>, vector<256x128xf32>, vector<8x128xf32> -> vector<8x128xf32>
    %c3 = arith.constant 3 : index
    %c0_35 = arith.constant 0 : index
    %c0_36 = arith.constant 0 : index
    %50 = vector.load %arg6[%c3, %c0_35, %c0_36] : memref<4x1x128xf32, #tpu.memory_space<vmem>>, vector<1x1x128xf32>
    %51 = vector.shape_cast %50 : vector<1x1x128xf32> to vector<1x128xf32>
    %52 = vector.broadcast %51 : vector<1x128xf32> to vector<8x128xf32>
    %53 = arith.addf %49, %52 : vector<8x128xf32>
    %c0_37 = arith.constant 0 : index
    %c0_38 = arith.constant 0 : index
    %54 = vector.load %arg8[%c0_37, %c0_38] : memref<8x128xf32, #tpu.memory_space<vmem>>, vector<8x128xf32>
    tpu.vector_store %arg8[%c0_37, %c0_38], %53 {strides = array<i32>} : memref<8x128xf32, #tpu.memory_space<vmem>>, vector<8x128xf32>,
    return
  }
  func.func @transform_0(%arg0: i32) -> (i32, i32) {
    %c0_i32 = arith.constant 0 : i32
    %c0_i32_0 = arith.constant 0 : i32
    return %arg0, %c0_i32 : i32, i32
  }
  func.func @transform_1(%arg0: i32) -> (i32, i32) {
    %c0_i32 = arith.constant 0 : i32
    %c0_i32_0 = arith.constant 0 : i32
    %c0_i32_1 = arith.constant 0 : i32
    return %c0_i32, %c0_i32_0 : i32, i32
  }
  func.func @transform_2(%arg0: i32) -> (i32, i32, i32) {
    %c0_i32 = arith.constant 0 : i32
    %c0_i32_0 = arith.constant 0 : i32
    %c0_i32_1 = arith.constant 0 : i32
    %c0_i32_2 = arith.constant 0 : i32
    return %c0_i32, %c0_i32_0, %c0_i32_1 : i32, i32, i32
  }
  func.func @transform_3(%arg0: i32) -> (i32, i32) {
    %c0_i32 = arith.constant 0 : i32
    %c0_i32_0 = arith.constant 0 : i32
    %c0_i32_1 = arith.constant 0 : i32
    return %c0_i32, %c0_i32_0 : i32, i32
  }
  func.func @transform_4(%arg0: i32) -> (i32, i32) {
    %c0_i32 = arith.constant 0 : i32
    %c0_i32_0 = arith.constant 0 : i32
    %c0_i32_1 = arith.constant 0 : i32
    return %c0_i32, %c0_i32_0 : i32, i32
  }
  func.func @transform_5(%arg0: i32) -> (i32, i32, i32) {
    %c0_i32 = arith.constant 0 : i32
    %c0_i32_0 = arith.constant 0 : i32
    %c0_i32_1 = arith.constant 0 : i32
    %c0_i32_2 = arith.constant 0 : i32
    return %c0_i32, %c0_i32_0, %c0_i32_1 : i32, i32, i32
  }
  func.func @transform_6(%arg0: i32) -> (i32, i32) {
    %c0_i32 = arith.constant 0 : i32
    %c0_i32_0 = arith.constant 0 : i32
    %c0_i32_1 = arith.constant 0 : i32
    return %c0_i32, %c0_i32_0 : i32, i32
  }
  func.func @transform_7(%arg0: i32) -> (i32, i32) {
    %c0_i32 = arith.constant 0 : i32
    %c0_i32_0 = arith.constant 0 : i32
    return %arg0, %c0_i32 : i32, i32
  }
}

</mosaic_0001>

<llo_original>
// kernel: tpu_custom_call.1
$region0: #{tpu_custom_call.1}
  #allocation0 [shape = 'u32[]', space=smem, size = 0x4, offset = 0x4, fixed_abs, tag = 'smem constant byte address 0x4 - core index']
  #allocation1 [shape = 'u32[144,128]{1,0:T(1,128)}', space=vmem, size = 0x12000, scoped, tag = 'internal scratch']
  %s0 = inlined_call_operand.hbm [shape: f32[8,17], index: 0, kind: input, shape index: {}]
  %s1 = inlined_call_operand.hbm [shape: f32[17,256], index: 1, kind: input, shape index: {}]
  %s2 = inlined_call_operand.hbm [shape: f32[3,128,256], index: 2, kind: input, shape index: {}]
  %s3 = inlined_call_operand.hbm [shape: f32[128,128], index: 3, kind: input, shape index: {}]
  %s4 = inlined_call_operand.hbm [shape: f32[256,128], index: 4, kind: input, shape index: {}]
  %s5 = inlined_call_operand.vmem [shape: f32[4,1,128], index: 5, kind: input, shape index: {}]
  %s6 = inlined_call_operand.vmem [shape: f32[1,256], index: 6, kind: input, shape index: {}]
  %s7 = inlined_call_operand.hbm [shape: f32[8,128], index: 7, kind: output, shape index: {}]
  %s8 = sld [smem:[#allocation0]]
  $region58: #{tpu_custom_call.1} parent=0
    _
  %s10 = ssub.s32 1, %s8
  %s11 = scalar_select 0, %s10, %s8
  $region1: #{tpu_custom_call.1} parent=0
    #allocation2 [shape = 'u8[4096]{0}', space=vmem, size = 0x1000, scoped, tag = 'input window, operand 0, single buffered']
    #allocation3 [shape = 's32[1]{0}', space=sflag, size = 0x4, scoped, tag = 'scoped memory for tpu_custom_call.1']
    #allocation4 [shape = 's32[1]{0}', space=sflag, size = 0x4, scoped, tag = 'scoped memory for tpu_custom_call.1']
    #allocation5 [shape = 'u8[24576]{0}', space=vmem, size = 0x6000, scoped, tag = 'input window, operand 1, single buffered']
    #allocation6 [shape = 's32[1]{0}', space=sflag, size = 0x4, scoped, tag = 'scoped memory for tpu_custom_call.1']
    #allocation7 [shape = 'u8[393216]{0}', space=vmem, size = 0x60000, scoped, tag = 'input window, operand 2, single buffered']
    #allocation8 [shape = 'u8[65536]{0}', space=vmem, size = 0x10000, scoped, tag = 'input window, operand 3, single buffered']
    #allocation9 [shape = 's32[1]{0}', space=sflag, size = 0x4, scoped, tag = 'scoped memory for tpu_custom_call.1']
    #allocation10 [shape = 'u8[131072]{0}', space=vmem, size = 0x20000, scoped, tag = 'input window, operand 4, single buffered']
    #allocation11 [shape = 'u8[4096]{0}', space=vmem, size = 0x1000, scoped, tag = 'output window, operand 0, single buffered']
    %12 = vsyncpa [#allocation3], 0
    %13 = vsyncpa [#allocation6], 0
    %14 = vsyncpa [#allocation9], 0
    %15 = vsyncpa [#allocation4], 0
    // Predicated region
    $region2: #{tpu_custom_call.1} parent=1 // pred_check
      _
    $region3: #{tpu_custom_call.1} parent=1 // pred_check_branch
      %17 = sbr.rel (0) target = $region5
    $region4: #{tpu_custom_call.1} parent=1 // pred_region
      %s19 = ssub.s32 128, 128
      %20 = vsyncadd [#allocation3], %s19
      %s22 = sshll.u32 [#allocation2], 4
      %s23 = int_to_ptr.vmem [resolvable:$true] %s22
      %25 = dma.hbm_to_vmem [thread:$0]  %s0, 128, %s23, [#allocation3]
    $region5: #{tpu_custom_call.1} parent=1 // pred_fallthru
      _
    // Predicated region
    $region6: #{tpu_custom_call.1} parent=1 // pred_check
      _
    $region7: #{tpu_custom_call.1} parent=1 // pred_check_branch
      %27 = sbr.rel (0) target = $region9
    $region8: #{tpu_custom_call.1} parent=1 // pred_region
      %s29 = ssub.s32 768, 768
      %30 = vsyncadd [#allocation6], %s29
      %s31 = sshll.u32 [#allocation5], 4
      %s32 = int_to_ptr.vmem [resolvable:$true] %s31
      %37 = dma.hbm_to_vmem [thread:$0]  %s1, 768, %s32, [#allocation6], 256, 256, 16
    $region9: #{tpu_custom_call.1} parent=1 // pred_fallthru
      _
    // Predicated region
    $region10: #{tpu_custom_call.1} parent=1 // pred_check
      _
    $region11: #{tpu_custom_call.1} parent=1 // pred_check_branch
      %39 = sbr.rel (0) target = $region13
    $region12: #{tpu_custom_call.1} parent=1 // pred_region
      %s41 = ssub.s32 12288, 12288
      %42 = vsyncadd [#allocation6], %s41
      %s43 = sshll.u32 [#allocation7], 4
      %s44 = int_to_ptr.vmem [resolvable:$true] %s43
      %49 = dma.hbm_to_vmem [thread:$0]  %s2, 12288, %s44, [#allocation6], 256, 256, 16
    $region13: #{tpu_custom_call.1} parent=1 // pred_fallthru
      _
    // Predicated region
    $region14: #{tpu_custom_call.1} parent=1 // pred_check
      _
    $region15: #{tpu_custom_call.1} parent=1 // pred_check_branch
      %51 = sbr.rel (0) target = $region17
    $region16: #{tpu_custom_call.1} parent=1 // pred_region
      %s53 = ssub.s32 2048, 2048
      %54 = vsyncadd [#allocation9], %s53
      %s55 = sshll.u32 [#allocation8], 4
      %s56 = int_to_ptr.vmem [resolvable:$true] %s55
      %61 = dma.hbm_to_vmem [thread:$0]  %s3, 2048, %s56, [#allocation9], 128, 128, 8
    $region17: #{tpu_custom_call.1} parent=1 // pred_fallthru
      _
    // Predicated region
    $region18: #{tpu_custom_call.1} parent=1 // pred_check
      _
    $region19: #{tpu_custom_call.1} parent=1 // pred_check_branch
      %63 = sbr.rel (0) target = $region21
    $region20: #{tpu_custom_call.1} parent=1 // pred_region
      %s65 = ssub.s32 4096, 4096
      %66 = vsyncadd [#allocation9], %s65
      %s67 = sshll.u32 [#allocation10], 4
      %s68 = int_to_ptr.vmem [resolvable:$true] %s67
      %73 = dma.hbm_to_vmem [thread:$0]  %s4, 4096, %s68, [#allocation9], 128, 128, 8
    $region21: #{tpu_custom_call.1} parent=1 // pred_fallthru
      _
    // Predicated region
    $region22: #{tpu_custom_call.1} parent=1 // pred_check
      _
    $region23: #{tpu_custom_call.1} parent=1 // pred_check_branch
      %75 = sbr.rel (0) target = $region25
    $region24: #{tpu_custom_call.1} parent=1 // pred_region
      _
    $region25: #{tpu_custom_call.1} parent=1 // pred_fallthru
      _
    // Predicated region
    $region26: #{tpu_custom_call.1} parent=1 // pred_check
      _
    $region27: #{tpu_custom_call.1} parent=1 // pred_check_branch
      %77 = sbr.rel (0) target = $region29
    $region28: #{tpu_custom_call.1} parent=1 // pred_region
      _
    $region29: #{tpu_custom_call.1} parent=1 // pred_fallthru
      _
    // Predicated region
    $region30: #{tpu_custom_call.1} parent=1 // pred_check
      _
    $region31: #{tpu_custom_call.1} parent=1 // pred_check_branch
      %79 = sbr.rel (0) target = $region33
    $region32: #{tpu_custom_call.1} parent=1 // pred_region
      %80 = dma.done [#allocation3], 128
    $region33: #{tpu_custom_call.1} parent=1 // pred_fallthru
      _
    // Predicated region
    $region34: #{tpu_custom_call.1} parent=1 // pred_check
      _
    $region35: #{tpu_custom_call.1} parent=1 // pred_check_branch
      %82 = sbr.rel (0) target = $region37
    $region36: #{tpu_custom_call.1} parent=1 // pred_region
      %83 = dma.done [#allocation6], 768
    $region37: #{tpu_custom_call.1} parent=1 // pred_fallthru
      _
    // Predicated region
    $region38: #{tpu_custom_call.1} parent=1 // pred_check
      _
    $region39: #{tpu_custom_call.1} parent=1 // pred_check_branch
      %85 = sbr.rel (0) target = $region41
    $region40: #{tpu_custom_call.1} parent=1 // pred_region
      %86 = dma.done [#allocation6], 12288
    $region41: #{tpu_custom_call.1} parent=1 // pred_fallthru
      _
    // Predicated region
    $region42: #{tpu_custom_call.1} parent=1 // pred_check
      _
    $region43: #{tpu_custom_call.1} parent=1 // pred_check_branch
      %88 = sbr.rel (0) target = $region45
    $region44: #{tpu_custom_call.1} parent=1 // pred_region
      %89 = dma.done [#allocation9], 2048
    $region45: #{tpu_custom_call.1} parent=1 // pred_fallthru
      _
    // Predicated region
    $region46: #{tpu_custom_call.1} parent=1 // pred_check
      _
    $region47: #{tpu_custom_call.1} parent=1 // pred_check_branch
      %91 = sbr.rel (0) target = $region49
    $region48: #{tpu_custom_call.1} parent=1 // pred_region
      %92 = dma.done [#allocation9], 4096
    $region49: #{tpu_custom_call.1} parent=1 // pred_fallthru
      _
    %v93 = vld [vmem:[#allocation2] sm:$0xff]
    %v94 = vld [vmem:[#allocation5] sm:$0xff]
    %v95 = vld [vmem:[#allocation5 + $0x8] sm:$0xff]
    %v96 = vld [vmem:[#allocation5 + $0x10] sm:$0xff]
    %v97 = vld [vmem:[#allocation5 + $0x18] sm:$0xff]
    %v98 = vld [vmem:[#allocation5 + $0x20] sm:$0x1]
    %v99 = vld [vmem:[#allocation5 + $0x28] sm:$0x1]
    %vm100 = vcmask 138240
    %v102 = vsel %vm100, %v93, 0
    %vm104 = vcmask 1040384
    %v106 = vsel %vm104, %v98, 0
    %v109 = vsel %vm104, %v99, 0
    %111 = vmatprep.subr.mxu0 0.0
    %112 = vmatpush1.msra.mxu0 0.0
    %113 = vmatprep.subr.mxu0 0.0
    %114 = vmatpush1.msra.mxu0 0.0
    %115 = vmatprep.subr.mxu0 0.0
    %116 = vmatpush1.msra.mxu0 0.0
    %117 = vmatprep.subr.mxu0 0.0
    %118 = vmatpush1.msra.mxu0 0.0
    %119 = vmatprep.subr.mxu0 0.0
    %120 = vmatpush1.msra.mxu0 0.0
    %121 = vmatprep.subr.mxu0 0.0
    %122 = vmatpush1.msra.mxu0 0.0
    %123 = vmatprep.subr.mxu0 0.0
    %124 = vmatpush1.msra.mxu0 0.0
    %125 = vmatprep.subr.mxu0 0.0
    %126 = vmatpush1.msra.mxu0 0.0
    %127 = vmatprep.subr.mxu0 0.0
    %128 = vmatpush1.msra.mxu0 0.0
    %129 = vmatprep.subr.mxu0 0.0
    %130 = vmatpush1.msra.mxu0 0.0
    %131 = vmatprep.subr.mxu0 0.0
    %132 = vmatpush1.msra.mxu0 0.0
    %133 = vmatprep.subr.mxu0 0.0
    %134 = vmatpush1.msra.mxu0 0.0
    %135 = vmatprep.subr.mxu0 0.0
    %136 = vmatpush1.msra.mxu0 0.0
    %137 = vmatprep.subr.mxu0 %v109
    %138 = vmatpush1.msra.mxu0 %v106
    %139 = vmatprep.subr.mxu0 %v97
    %140 = vmatpush1.msra.mxu0 %v96
    %141 = vmatprep.subr.mxu0 %v95
    %142 = vmatpush1.msra.mxu0 %v94
    %143 = vmatprep.subr.mxu0 0.0
    %144 = vmatpush2.msra.mxu0 0.0
    %145 = vmatprep.subr.mxu0 0.0
    %146 = vmatpush2.msra.mxu0 0.0
    %147 = vmatprep.subr.mxu0 0.0
    %148 = vmatpush2.msra.mxu0 0.0
    %149 = vmatprep.subr.mxu0 0.0
    %150 = vmatpush2.msra.mxu0 0.0
    %151 = vmatprep.subr.mxu0 0.0
    %152 = vmatpush2.msra.mxu0 0.0
    %153 = vmatprep.subr.mxu0 0.0
    %154 = vmatpush2.msra.mxu0 0.0
    %155 = vmatprep.subr.mxu0 0.0
    %156 = vmatpush2.msra.mxu0 0.0
    %157 = vmatprep.subr.mxu0 0.0
    %158 = vmatpush2.msra.mxu0 0.0
    %159 = vmatprep.subr.mxu0 0.0
    %160 = vmatpush2.msra.mxu0 0.0
    %161 = vmatprep.subr.mxu0 0.0
    %162 = vmatpush2.msra.mxu0 0.0
    %163 = vmatprep.subr.mxu0 0.0
    %164 = vmatpush2.msra.mxu0 0.0
    %165 = vmatprep.subr.mxu0 0.0
    %166 = vmatpush2.msra.mxu0 0.0
    %167 = vmatprep.subr.mxu0 0.0
    %168 = vmatpush2.msra.mxu0 0.0
    %169 = vmatprep.subr.mxu0 0.0
    %170 = vmatpush2.msra.mxu0 0.0
    %171 = vmatprep.subr.mxu0 0.0
    %172 = vmatpush2.msra.mxu0 0.0
    %173 = vmatprep.subr.mxu0 0.0
    %174 = vmatpush2.msra.mxu0 0.0
    %175 = vmatprep.mubr.f32.mxu0 0.0
    %176 = vmatmul.mubr.f32.gmra.mxu0 %v102
    %v177 = vpop.f32.mrf.mxu0
    %v178 = vadd.f32 0.0, %v177
    %v179 = vpop.f32.mrf.mxu0
    %v180 = vadd.f32 0.0, %v179
    %181 = vdwg.mxu0
    %v182 = vmax.f32 %v178, %v180
    %v183 = vmax.f32 %v182, 0.0
    %v184 = vld [vmem:[#allocation7] sm:$0xff]
    %v185 = vld [vmem:[#allocation7 + $0x8] sm:$0xff]
    %v186 = vld [vmem:[#allocation7 + $0x10] sm:$0xff]
    %v187 = vld [vmem:[#allocation7 + $0x18] sm:$0xff]
    %v188 = vld [vmem:[#allocation7 + $0x20] sm:$0xff]
    %v189 = vld [vmem:[#allocation7 + $0x28] sm:$0xff]
    %v190 = vld [vmem:[#allocation7 + $0x30] sm:$0xff]
    %v191 = vld [vmem:[#allocation7 + $0x38] sm:$0xff]
    %v192 = vld [vmem:[#allocation7 + $0x40] sm:$0xff]
    %v193 = vld [vmem:[#allocation7 + $0x48] sm:$0xff]
    %v194 = vld [vmem:[#allocation7 + $0x50] sm:$0xff]
    %v195 = vld [vmem:[#allocation7 + $0x58] sm:$0xff]
    %v196 = vld [vmem:[#allocation7 + $0x60] sm:$0xff]
    %v197 = vld [vmem:[#allocation7 + $0x68] sm:$0xff]
    %v198 = vld [vmem:[#allocation7 + $0x70] sm:$0xff]
    %v199 = vld [vmem:[#allocation7 + $0x78] sm:$0xff]
    %v200 = vld [vmem:[#allocation7 + $0x80] sm:$0xff]
    %v201 = vld [vmem:[#allocation7 + $0x88] sm:$0xff]
    %v202 = vld [vmem:[#allocation7 + $0x90] sm:$0xff]
    %v203 = vld [vmem:[#allocation7 + $0x98] sm:$0xff]
    %v204 = vld [vmem:[#allocation7 + $0xa0] sm:$0xff]
    %v205 = vld [vmem:[#allocation7 + $0xa8] sm:$0xff]
    %v206 = vld [vmem:[#allocation7 + $0xb0] sm:$0xff]
    %v207 = vld [vmem:[#allocation7 + $0xb8] sm:$0xff]
    %v208 = vld [vmem:[#allocation7 + $0xc0] sm:$0xff]
    %v209 = vld [vmem:[#allocation7 + $0xc8] sm:$0xff]
    %v210 = vld [vmem:[#allocation7 + $0xd0] sm:$0xff]
    %v211 = vld [vmem:[#allocation7 + $0xd8] sm:$0xff]
    %v212 = vld [vmem:[#allocation7 + $0xe0] sm:$0xff]
    %v213 = vld [vmem:[#allocation7 + $0xe8] sm:$0xff]
    %v214 = vld [vmem:[#allocation7 + $0xf0] sm:$0xff]
    %v215 = vld [vmem:[#allocation7 + $0xf8] sm:$0xff]
    %216 = vmatprep.subr.mxu0 %v215
    %217 = vmatpush1.msra.mxu0 %v214
    %218 = vmatprep.subr.mxu0 %v213
    %219 = vmatpush1.msra.mxu0 %v212
    %220 = vmatprep.subr.mxu0 %v211
    %221 = vmatpush1.msra.mxu0 %v210
    %222 = vmatprep.subr.mxu0 %v209
    %223 = vmatpush1.msra.mxu0 %v208
    %224 = vmatprep.subr.mxu0 %v207
    %225 = vmatpush1.msra.mxu0 %v206
    %226 = vmatprep.subr.mxu0 %v205
    %227 = vmatpush1.msra.mxu0 %v204
    %228 = vmatprep.subr.mxu0 %v203
    %229 = vmatpush1.msra.mxu0 %v202
    %230 = vmatprep.subr.mxu0 %v201
    %231 = vmatpush1.msra.mxu0 %v200
    %232 = vmatprep.subr.mxu0 %v199
    %233 = vmatpush1.msra.mxu0 %v198
    %234 = vmatprep.subr.mxu0 %v197
    %235 = vmatpush1.msra.mxu0 %v196
    %236 = vmatprep.subr.mxu0 %v195
    %237 = vmatpush1.msra.mxu0 %v194
    %238 = vmatprep.subr.mxu0 %v193
    %239 = vmatpush1.msra.mxu0 %v192
    %240 = vmatprep.subr.mxu0 %v191
    %241 = vmatpush1.msra.mxu0 %v190
    %242 = vmatprep.subr.mxu0 %v189
    %243 = vmatpush1.msra.mxu0 %v188
    %244 = vmatprep.subr.mxu0 %v187
    %245 = vmatpush1.msra.mxu0 %v186
    %246 = vmatprep.subr.mxu0 %v185
    %247 = vmatpush1.msra.mxu0 %v184
    %248 = vmatprep.subr.mxu0 0.0
    %249 = vmatpush2.msra.mxu0 0.0
    %250 = vmatprep.subr.mxu0 0.0
    %251 = vmatpush2.msra.mxu0 0.0
    %252 = vmatprep.subr.mxu0 0.0
    %253 = vmatpush2.msra.mxu0 0.0
    %254 = vmatprep.subr.mxu0 0.0
    %255 = vmatpush2.msra.mxu0 0.0
    %256 = vmatprep.subr.mxu0 0.0
    %257 = vmatpush2.msra.mxu0 0.0
    %258 = vmatprep.subr.mxu0 0.0
    %259 = vmatpush2.msra.mxu0 0.0
    %260 = vmatprep.subr.mxu0 0.0
    %261 = vmatpush2.msra.mxu0 0.0
    %262 = vmatprep.subr.mxu0 0.0
    %263 = vmatpush2.msra.mxu0 0.0
    %264 = vmatprep.subr.mxu0 0.0
    %265 = vmatpush2.msra.mxu0 0.0
    %266 = vmatprep.subr.mxu0 0.0
    %267 = vmatpush2.msra.mxu0 0.0
    %268 = vmatprep.subr.mxu0 0.0
    %269 = vmatpush2.msra.mxu0 0.0
    %270 = vmatprep.subr.mxu0 0.0
    %271 = vmatpush2.msra.mxu0 0.0
    %272 = vmatprep.subr.mxu0 0.0
    %273 = vmatpush2.msra.mxu0 0.0
    %274 = vmatprep.subr.mxu0 0.0
    %275 = vmatpush2.msra.mxu0 0.0
    %276 = vmatprep.subr.mxu0 0.0
    %277 = vmatpush2.msra.mxu0 0.0
    %278 = vmatprep.subr.mxu0 0.0
    %279 = vmatpush2.msra.mxu0 0.0
    %280 = vmatprep.mubr.f32.mxu0 0.0
    %281 = vmatmul.mubr.f32.gmra.mxu0 %v183
    %v282 = vpop.f32.mrf.mxu0
    %v283 = vadd.f32 0.0, %v282
    %v284 = vpop.f32.mrf.mxu0
    %v285 = vadd.f32 0.0, %v284
    %286 = vdwg.mxu0
    %v287 = vld [vmem:[%s5] sm:$0x1]
    %v288 = vmax.f32 %v283, %v285
    %v290 = vlaneseq
    %v291 = vshrl.u32 %v290, 7
    %v292 = vsub.s32 0, %v291
    %v293 = vrot.slane %v287, %v292
    %v295 = vadd.f32 %v288, %v293
    %v296 = vmax.f32 %v295, 0.0
    %s297 = scalar_lea.vmem [#allocation7], 256
    %v298 = vld [vmem:[%s297] sm:$0xff]
    %v299 = vld [vmem:[%s297 + $0x8] sm:$0xff]
    %v300 = vld [vmem:[%s297 + $0x10] sm:$0xff]
    %v301 = vld [vmem:[%s297 + $0x18] sm:$0xff]
    %v302 = vld [vmem:[%s297 + $0x20] sm:$0xff]
    %v303 = vld [vmem:[%s297 + $0x28] sm:$0xff]
    %v304 = vld [vmem:[%s297 + $0x30] sm:$0xff]
    %v305 = vld [vmem:[%s297 + $0x38] sm:$0xff]
    %v306 = vld [vmem:[%s297 + $0x40] sm:$0xff]
    %v307 = vld [vmem:[%s297 + $0x48] sm:$0xff]
    %v308 = vld [vmem:[%s297 + $0x50] sm:$0xff]
    %v309 = vld [vmem:[%s297 + $0x58] sm:$0xff]
    %v310 = vld [vmem:[%s297 + $0x60] sm:$0xff]
    %v311 = vld [vmem:[%s297 + $0x68] sm:$0xff]
    %v312 = vld [vmem:[%s297 + $0x70] sm:$0xff]
    %v313 = vld [vmem:[%s297 + $0x78] sm:$0xff]
    %v314 = vld [vmem:[%s297 + $0x80] sm:$0xff]
    %v315 = vld [vmem:[%s297 + $0x88] sm:$0xff]
    %v316 = vld [vmem:[%s297 + $0x90] sm:$0xff]
    %v317 = vld [vmem:[%s297 + $0x98] sm:$0xff]
    %v318 = vld [vmem:[%s297 + $0xa0] sm:$0xff]
    %v319 = vld [vmem:[%s297 + $0xa8] sm:$0xff]
    %v320 = vld [vmem:[%s297 + $0xb0] sm:$0xff]
    %v321 = vld [vmem:[%s297 + $0xb8] sm:$0xff]
    %v322 = vld [vmem:[%s297 + $0xc0] sm:$0xff]
    %v323 = vld [vmem:[%s297 + $0xc8] sm:$0xff]
    %v324 = vld [vmem:[%s297 + $0xd0] sm:$0xff]
    %v325 = vld [vmem:[%s297 + $0xd8] sm:$0xff]
    %v326 = vld [vmem:[%s297 + $0xe0] sm:$0xff]
    %v327 = vld [vmem:[%s297 + $0xe8] sm:$0xff]
    %v328 = vld [vmem:[%s297 + $0xf0] sm:$0xff]
    %v329 = vld [vmem:[%s297 + $0xf8] sm:$0xff]
    %330 = vmatprep.subr.mxu0 %v329
    %331 = vmatpush1.msra.mxu0 %v328
    %332 = vmatprep.subr.mxu0 %v327
    %333 = vmatpush1.msra.mxu0 %v326
    %334 = vmatprep.subr.mxu0 %v325
    %335 = vmatpush1.msra.mxu0 %v324
    %336 = vmatprep.subr.mxu0 %v323
    %337 = vmatpush1.msra.mxu0 %v322
    %338 = vmatprep.subr.mxu0 %v321
    %339 = vmatpush1.msra.mxu0 %v320
    %340 = vmatprep.subr.mxu0 %v319
    %341 = vmatpush1.msra.mxu0 %v318
    %342 = vmatprep.subr.mxu0 %v317
    %343 = vmatpush1.msra.mxu0 %v316
    %344 = vmatprep.subr.mxu0 %v315
    %345 = vmatpush1.msra.mxu0 %v314
    %346 = vmatprep.subr.mxu0 %v313
    %347 = vmatpush1.msra.mxu0 %v312
    %348 = vmatprep.subr.mxu0 %v311
    %349 = vmatpush1.msra.mxu0 %v310
    %350 = vmatprep.subr.mxu0 %v309
    %351 = vmatpush1.msra.mxu0 %v308
    %352 = vmatprep.subr.mxu0 %v307
    %353 = vmatpush1.msra.mxu0 %v306
    %354 = vmatprep.subr.mxu0 %v305
    %355 = vmatpush1.msra.mxu0 %v304
    %356 = vmatprep.subr.mxu0 %v303
    %357 = vmatpush1.msra.mxu0 %v302
    %358 = vmatprep.subr.mxu0 %v301
    %359 = vmatpush1.msra.mxu0 %v300
    %360 = vmatprep.subr.mxu0 %v299
    %361 = vmatpush1.msra.mxu0 %v298
    %362 = vmatprep.subr.mxu0 0.0
    %363 = vmatpush2.msra.mxu0 0.0
    %364 = vmatprep.subr.mxu0 0.0
    %365 = vmatpush2.msra.mxu0 0.0
    %366 = vmatprep.subr.mxu0 0.0
    %367 = vmatpush2.msra.mxu0 0.0
    %368 = vmatprep.subr.mxu0 0.0
    %369 = vmatpush2.msra.mxu0 0.0
    %370 = vmatprep.subr.mxu0 0.0
    %371 = vmatpush2.msra.mxu0 0.0
    %372 = vmatprep.subr.mxu0 0.0
    %373 = vmatpush2.msra.mxu0 0.0
    %374 = vmatprep.subr.mxu0 0.0
    %375 = vmatpush2.msra.mxu0 0.0
    %376 = vmatprep.subr.mxu0 0.0
    %377 = vmatpush2.msra.mxu0 0.0
    %378 = vmatprep.subr.mxu0 0.0
    %379 = vmatpush2.msra.mxu0 0.0
    %380 = vmatprep.subr.mxu0 0.0
    %381 = vmatpush2.msra.mxu0 0.0
    %382 = vmatprep.subr.mxu0 0.0
    %383 = vmatpush2.msra.mxu0 0.0
    %384 = vmatprep.subr.mxu0 0.0
    %385 = vmatpush2.msra.mxu0 0.0
    %386 = vmatprep.subr.mxu0 0.0
    %387 = vmatpush2.msra.mxu0 0.0
    %388 = vmatprep.subr.mxu0 0.0
    %389 = vmatpush2.msra.mxu0 0.0
    %390 = vmatprep.subr.mxu0 0.0
    %391 = vmatpush2.msra.mxu0 0.0
    %392 = vmatprep.subr.mxu0 0.0
    %393 = vmatpush2.msra.mxu0 0.0
    %394 = vmatprep.mubr.f32.mxu0 0.0
    %395 = vmatmul.mubr.f32.gmra.mxu0 %v296
    %v396 = vpop.f32.mrf.mxu0
    %v397 = vadd.f32 0.0, %v396
    %v398 = vpop.f32.mrf.mxu0
    %v399 = vadd.f32 0.0, %v398
    %400 = vdwg.mxu0
    %s401 = scalar_lea.vmem %s5, 1
    %v402 = vld [vmem:[%s401] sm:$0x1]
    %v403 = vmax.f32 %v397, %v399
    %v405 = vlaneseq
    %v406 = vshrl.u32 %v405, 7
    %v407 = vsub.s32 0, %v406
    %v408 = vrot.slane %v402, %v407
    %v410 = vadd.f32 %v403, %v408
    %v411 = vmax.f32 %v410, 0.0
    %v412 = vld [vmem:[#allocation8] sm:$0xff]
    %v413 = vld [vmem:[#allocation8 + $0x8] sm:$0xff]
    %v414 = vld [vmem:[#allocation8 + $0x10] sm:$0xff]
    %v415 = vld [vmem:[#allocation8 + $0x18] sm:$0xff]
    %v416 = vld [vmem:[#allocation8 + $0x20] sm:$0xff]
    %v417 = vld [vmem:[#allocation8 + $0x28] sm:$0xff]
    %v418 = vld [vmem:[#allocation8 + $0x30] sm:$0xff]
    %v419 = vld [vmem:[#allocation8 + $0x38] sm:$0xff]
    %v420 = vld [vmem:[#allocation8 + $0x40] sm:$0xff]
    %v421 = vld [vmem:[#allocation8 + $0x48] sm:$0xff]
    %v422 = vld [vmem:[#allocation8 + $0x50] sm:$0xff]
    %v423 = vld [vmem:[#allocation8 + $0x58] sm:$0xff]
    %v424 = vld [vmem:[#allocation8 + $0x60] sm:$0xff]
    %v425 = vld [vmem:[#allocation8 + $0x68] sm:$0xff]
    %v426 = vld [vmem:[#allocation8 + $0x70] sm:$0xff]
    %v427 = vld [vmem:[#allocation8 + $0x78] sm:$0xff]
    %s428 = scalar_lea.vmem %s5, 2
    %v429 = vld [vmem:[%s428] sm:$0x1]
    %v431 = vlaneseq
    %v432 = vshrl.u32 %v431, 7
    %v433 = vsub.s32 0, %v432
    %v434 = vrot.slane %v429, %v433
    %436 = vmatprep.subr.mxu0 0.0
    %437 = vmatpush1.msra.mxu0 %v427
    %438 = vmatprep.subr.mxu0 0.0
    %439 = vmatpush1.msra.mxu0 %v426
    %440 = vmatprep.subr.mxu0 0.0
    %441 = vmatpush1.msra.mxu0 %v425
    %442 = vmatprep.subr.mxu0 0.0
    %443 = vmatpush1.msra.mxu0 %v424
    %444 = vmatprep.subr.mxu0 0.0
    %445 = vmatpush1.msra.mxu0 %v423
    %446 = vmatprep.subr.mxu0 0.0
    %447 = vmatpush1.msra.mxu0 %v422
    %448 = vmatprep.subr.mxu0 0.0
    %449 = vmatpush1.msra.mxu0 %v421
    %450 = vmatprep.subr.mxu0 0.0
    %451 = vmatpush1.msra.mxu0 %v420
    %452 = vmatprep.subr.mxu0 0.0
    %453 = vmatpush1.msra.mxu0 %v419
    %454 = vmatprep.subr.mxu0 0.0
    %455 = vmatpush1.msra.mxu0 %v418
    %456 = vmatprep.subr.mxu0 0.0
    %457 = vmatpush1.msra.mxu0 %v417
    %458 = vmatprep.subr.mxu0 0.0
    %459 = vmatpush1.msra.mxu0 %v416
    %460 = vmatprep.subr.mxu0 0.0
    %461 = vmatpush1.msra.mxu0 %v415
    %462 = vmatprep.subr.mxu0 0.0
    %463 = vmatpush1.msra.mxu0 %v414
    %464 = vmatprep.subr.mxu0 0.0
    %465 = vmatpush1.msra.mxu0 %v413
    %466 = vmatprep.subr.mxu0 0.0
    %467 = vmatpush1.msra.mxu0 %v412
    %468 = vmatprep.subr.mxu0 0.0
    %469 = vmatpush2.msra.mxu0 0.0
    %470 = vmatprep.subr.mxu0 0.0
    %471 = vmatpush2.msra.mxu0 0.0
    %472 = vmatprep.subr.mxu0 0.0
    %473 = vmatpush2.msra.mxu0 0.0
    %474 = vmatprep.subr.mxu0 0.0
    %475 = vmatpush2.msra.mxu0 0.0
    %476 = vmatprep.subr.mxu0 0.0
    %477 = vmatpush2.msra.mxu0 0.0
    %478 = vmatprep.subr.mxu0 0.0
    %479 = vmatpush2.msra.mxu0 0.0
    %480 = vmatprep.subr.mxu0 0.0
    %481 = vmatpush2.msra.mxu0 0.0
    %482 = vmatprep.subr.mxu0 0.0
    %483 = vmatpush2.msra.mxu0 0.0
    %484 = vmatprep.subr.mxu0 0.0
    %485 = vmatpush2.msra.mxu0 0.0
    %486 = vmatprep.subr.mxu0 0.0
    %487 = vmatpush2.msra.mxu0 0.0
    %488 = vmatprep.subr.mxu0 0.0
    %489 = vmatpush2.msra.mxu0 0.0
    %490 = vmatprep.subr.mxu0 0.0
    %491 = vmatpush2.msra.mxu0 0.0
    %492 = vmatprep.subr.mxu0 0.0
    %493 = vmatpush2.msra.mxu0 0.0
    %494 = vmatprep.subr.mxu0 0.0
    %495 = vmatpush2.msra.mxu0 0.0
    %496 = vmatprep.subr.mxu0 0.0
    %497 = vmatpush2.msra.mxu0 0.0
    %498 = vmatprep.subr.mxu0 0.0
    %499 = vmatpush2.msra.mxu0 0.0
    %500 = vmatprep.mubr.f32.mxu0 0.0
    %501 = vmatmul.mubr.f32.gmra.mxu0 %v411
    %v502 = vpop.f32.mrf.mxu0
    %v503 = vadd.f32 %v434, %v502
    %v504 = vpop.f32.mrf.mxu0
    %505 = vdwg.mxu0
    %v506 = vmax.f32 %v503, 0.0
    %s507 = scalar_lea.vmem [#allocation7], 512
    %v508 = vld [vmem:[%s507] sm:$0xff]
    %v509 = vld [vmem:[%s507 + $0x8] sm:$0xff]
    %v510 = vld [vmem:[%s507 + $0x10] sm:$0xff]
    %v511 = vld [vmem:[%s507 + $0x18] sm:$0xff]
    %v512 = vld [vmem:[%s507 + $0x20] sm:$0xff]
    %v513 = vld [vmem:[%s507 + $0x28] sm:$0xff]
    %v514 = vld [vmem:[%s507 + $0x30] sm:$0xff]
    %v515 = vld [vmem:[%s507 + $0x38] sm:$0xff]
    %v516 = vld [vmem:[%s507 + $0x40] sm:$0xff]
    %v517 = vld [vmem:[%s507 + $0x48] sm:$0xff]
    %v518 = vld [vmem:[%s507 + $0x50] sm:$0xff]
    %v519 = vld [vmem:[%s507 + $0x58] sm:$0xff]
    %v520 = vld [vmem:[%s507 + $0x60] sm:$0xff]
    %v521 = vld [vmem:[%s507 + $0x68] sm:$0xff]
    %v522 = vld [vmem:[%s507 + $0x70] sm:$0xff]
    %v523 = vld [vmem:[%s507 + $0x78] sm:$0xff]
    %v524 = vld [vmem:[%s507 + $0x80] sm:$0xff]
    %v525 = vld [vmem:[%s507 + $0x88] sm:$0xff]
    %v526 = vld [vmem:[%s507 + $0x90] sm:$0xff]
    %v527 = vld [vmem:[%s507 + $0x98] sm:$0xff]
    %v528 = vld [vmem:[%s507 + $0xa0] sm:$0xff]
    %v529 = vld [vmem:[%s507 + $0xa8] sm:$0xff]
    %v530 = vld [vmem:[%s507 + $0xb0] sm:$0xff]
    %v531 = vld [vmem:[%s507 + $0xb8] sm:$0xff]
    %v532 = vld [vmem:[%s507 + $0xc0] sm:$0xff]
    %v533 = vld [vmem:[%s507 + $0xc8] sm:$0xff]
    %v534 = vld [vmem:[%s507 + $0xd0] sm:$0xff]
    %v535 = vld [vmem:[%s507 + $0xd8] sm:$0xff]
    %v536 = vld [vmem:[%s507 + $0xe0] sm:$0xff]
    %v537 = vld [vmem:[%s507 + $0xe8] sm:$0xff]
    %v538 = vld [vmem:[%s507 + $0xf0] sm:$0xff]
    %v539 = vld [vmem:[%s507 + $0xf8] sm:$0xff]
    %v540 = vld [vmem:[%s6] sm:$0x3]
    %v542 = vlaneseq
    %v543 = vshrl.u32 %v542, 7
    %v544 = vsub.s32 0, %v543
    %v545 = vrot.slane %v540, %v544
    %v546 = vlaneseq
    %v547 = vshrl.u32 %v546, 7
    %v548 = vsub.s32 1, %v547
    %v549 = vrot.slane %v540, %v548
    %552 = vmatprep.subr.mxu0 %v539
    %553 = vmatpush1.msra.mxu0 %v538
    %554 = vmatprep.subr.mxu0 %v537
    %555 = vmatpush1.msra.mxu0 %v536
    %556 = vmatprep.subr.mxu0 %v535
    %557 = vmatpush1.msra.mxu0 %v534
    %558 = vmatprep.subr.mxu0 %v533
    %559 = vmatpush1.msra.mxu0 %v532
    %560 = vmatprep.subr.mxu0 %v531
    %561 = vmatpush1.msra.mxu0 %v530
    %562 = vmatprep.subr.mxu0 %v529
    %563 = vmatpush1.msra.mxu0 %v528
    %564 = vmatprep.subr.mxu0 %v527
    %565 = vmatpush1.msra.mxu0 %v526
    %566 = vmatprep.subr.mxu0 %v525
    %567 = vmatpush1.msra.mxu0 %v524
    %568 = vmatprep.subr.mxu0 %v523
    %569 = vmatpush1.msra.mxu0 %v522
    %570 = vmatprep.subr.mxu0 %v521
    %571 = vmatpush1.msra.mxu0 %v520
    %572 = vmatprep.subr.mxu0 %v519
    %573 = vmatpush1.msra.mxu0 %v518
    %574 = vmatprep.subr.mxu0 %v517
    %575 = vmatpush1.msra.mxu0 %v516
    %576 = vmatprep.subr.mxu0 %v515
    %577 = vmatpush1.msra.mxu0 %v514
    %578 = vmatprep.subr.mxu0 %v513
    %579 = vmatpush1.msra.mxu0 %v512
    %580 = vmatprep.subr.mxu0 %v511
    %581 = vmatpush1.msra.mxu0 %v510
    %582 = vmatprep.subr.mxu0 %v509
    %583 = vmatpush1.msra.mxu0 %v508
    %584 = vmatprep.subr.mxu0 0.0
    %585 = vmatpush2.msra.mxu0 0.0
    %586 = vmatprep.subr.mxu0 0.0
    %587 = vmatpush2.msra.mxu0 0.0
    %588 = vmatprep.subr.mxu0 0.0
    %589 = vmatpush2.msra.mxu0 0.0
    %590 = vmatprep.subr.mxu0 0.0
    %591 = vmatpush2.msra.mxu0 0.0
    %592 = vmatprep.subr.mxu0 0.0
    %593 = vmatpush2.msra.mxu0 0.0
    %594 = vmatprep.subr.mxu0 0.0
    %595 = vmatpush2.msra.mxu0 0.0
    %596 = vmatprep.subr.mxu0 0.0
    %597 = vmatpush2.msra.mxu0 0.0
    %598 = vmatprep.subr.mxu0 0.0
    %599 = vmatpush2.msra.mxu0 0.0
    %600 = vmatprep.subr.mxu0 0.0
    %601 = vmatpush2.msra.mxu0 0.0
    %602 = vmatprep.subr.mxu0 0.0
    %603 = vmatpush2.msra.mxu0 0.0
    %604 = vmatprep.subr.mxu0 0.0
    %605 = vmatpush2.msra.mxu0 0.0
    %606 = vmatprep.subr.mxu0 0.0
    %607 = vmatpush2.msra.mxu0 0.0
    %608 = vmatprep.subr.mxu0 0.0
    %609 = vmatpush2.msra.mxu0 0.0
    %610 = vmatprep.subr.mxu0 0.0
    %611 = vmatpush2.msra.mxu0 0.0
    %612 = vmatprep.subr.mxu0 0.0
    %613 = vmatpush2.msra.mxu0 0.0
    %614 = vmatprep.subr.mxu0 0.0
    %615 = vmatpush2.msra.mxu0 0.0
    %616 = vmatprep.mubr.f32.mxu0 0.0
    %617 = vmatmul.mubr.f32.gmra.mxu0 %v506
    %v618 = vpop.f32.mrf.mxu0
    %v619 = vadd.f32 %v545, %v618
    %v620 = vpop.f32.mrf.mxu0
    %v621 = vadd.f32 %v549, %v620
    %622 = vdwg.mxu0
    %v623 = vmax.f32 %v619, 0.0
    %v624 = vmax.f32 %v621, 0.0
    %v625 = vld [vmem:[#allocation10] sm:$0xff]
    %v626 = vld [vmem:[#allocation10 + $0x8] sm:$0xff]
    %v627 = vld [vmem:[#allocation10 + $0x10] sm:$0xff]
    %v628 = vld [vmem:[#allocation10 + $0x18] sm:$0xff]
    %v629 = vld [vmem:[#allocation10 + $0x20] sm:$0xff]
    %v630 = vld [vmem:[#allocation10 + $0x28] sm:$0xff]
    %v631 = vld [vmem:[#allocation10 + $0x30] sm:$0xff]
    %v632 = vld [vmem:[#allocation10 + $0x38] sm:$0xff]
    %v633 = vld [vmem:[#allocation10 + $0x40] sm:$0xff]
    %v634 = vld [vmem:[#allocation10 + $0x48] sm:$0xff]
    %v635 = vld [vmem:[#allocation10 + $0x50] sm:$0xff]
    %v636 = vld [vmem:[#allocation10 + $0x58] sm:$0xff]
    %v637 = vld [vmem:[#allocation10 + $0x60] sm:$0xff]
    %v638 = vld [vmem:[#allocation10 + $0x68] sm:$0xff]
    %v639 = vld [vmem:[#allocation10 + $0x70] sm:$0xff]
    %v640 = vld [vmem:[#allocation10 + $0x78] sm:$0xff]
    %v641 = vld [vmem:[#allocation10 + $0x80] sm:$0xff]
    %v642 = vld [vmem:[#allocation10 + $0x88] sm:$0xff]
    %v643 = vld [vmem:[#allocation10 + $0x90] sm:$0xff]
    %v644 = vld [vmem:[#allocation10 + $0x98] sm:$0xff]
    %v645 = vld [vmem:[#allocation10 + $0xa0] sm:$0xff]
    %v646 = vld [vmem:[#allocation10 + $0xa8] sm:$0xff]
    %v647 = vld [vmem:[#allocation10 + $0xb0] sm:$0xff]
    %v648 = vld [vmem:[#allocation10 + $0xb8] sm:$0xff]
    %v649 = vld [vmem:[#allocation10 + $0xc0] sm:$0xff]
    %v650 = vld [vmem:[#allocation10 + $0xc8] sm:$0xff]
    %v651 = vld [vmem:[#allocation10 + $0xd0] sm:$0xff]
    %v652 = vld [vmem:[#allocation10 + $0xd8] sm:$0xff]
    %v653 = vld [vmem:[#allocation10 + $0xe0] sm:$0xff]
    %v654 = vld [vmem:[#allocation10 + $0xe8] sm:$0xff]
    %v655 = vld [vmem:[#allocation10 + $0xf0] sm:$0xff]
    %v656 = vld [vmem:[#allocation10 + $0xf8] sm:$0xff]
    %s657 = scalar_lea.vmem %s5, 3
    %v658 = vld [vmem:[%s657] sm:$0x1]
    %v660 = vlaneseq
    %v661 = vshrl.u32 %v660, 7
    %v662 = vsub.s32 0, %v661
    %v663 = vrot.slane %v658, %v662
    %665 = vmatprep.subr.mxu0 0.0
    %666 = vmatpush1.msra.mxu0 %v640
    %667 = vmatprep.subr.mxu0 0.0
    %668 = vmatpush1.msra.mxu0 %v639
    %669 = vmatprep.subr.mxu0 0.0
    %670 = vmatpush1.msra.mxu0 %v638
    %671 = vmatprep.subr.mxu0 0.0
    %672 = vmatpush1.msra.mxu0 %v637
    %673 = vmatprep.subr.mxu0 0.0
    %674 = vmatpush1.msra.mxu0 %v636
    %675 = vmatprep.subr.mxu0 0.0
    %676 = vmatpush1.msra.mxu0 %v635
    %677 = vmatprep.subr.mxu0 0.0
    %678 = vmatpush1.msra.mxu0 %v634
    %679 = vmatprep.subr.mxu0 0.0
    %680 = vmatpush1.msra.mxu0 %v633
    %681 = vmatprep.subr.mxu0 0.0
    %682 = vmatpush1.msra.mxu0 %v632
    %683 = vmatprep.subr.mxu0 0.0
    %684 = vmatpush1.msra.mxu0 %v631
    %685 = vmatprep.subr.mxu0 0.0
    %686 = vmatpush1.msra.mxu0 %v630
    %687 = vmatprep.subr.mxu0 0.0
    %688 = vmatpush1.msra.mxu0 %v629
    %689 = vmatprep.subr.mxu0 0.0
    %690 = vmatpush1.msra.mxu0 %v628
    %691 = vmatprep.subr.mxu0 0.0
    %692 = vmatpush1.msra.mxu0 %v627
    %693 = vmatprep.subr.mxu0 0.0
    %694 = vmatpush1.msra.mxu0 %v626
    %695 = vmatprep.subr.mxu0 0.0
    %696 = vmatpush1.msra.mxu0 %v625
    %697 = vmatprep.subr.mxu0 0.0
    %698 = vmatpush2.msra.mxu0 %v656
    %699 = vmatprep.subr.mxu0 0.0
    %700 = vmatpush2.msra.mxu0 %v655
    %701 = vmatprep.subr.mxu0 0.0
    %702 = vmatpush2.msra.mxu0 %v654
    %703 = vmatprep.subr.mxu0 0.0
    %704 = vmatpush2.msra.mxu0 %v653
    %705 = vmatprep.subr.mxu0 0.0
    %706 = vmatpush2.msra.mxu0 %v652
    %707 = vmatprep.subr.mxu0 0.0
    %708 = vmatpush2.msra.mxu0 %v651
    %709 = vmatprep.subr.mxu0 0.0
    %710 = vmatpush2.msra.mxu0 %v650
    %711 = vmatprep.subr.mxu0 0.0
    %712 = vmatpush2.msra.mxu0 %v649
    %713 = vmatprep.subr.mxu0 0.0
    %714 = vmatpush2.msra.mxu0 %v648
    %715 = vmatprep.subr.mxu0 0.0
    %716 = vmatpush2.msra.mxu0 %v647
    %717 = vmatprep.subr.mxu0 0.0
    %718 = vmatpush2.msra.mxu0 %v646
    %719 = vmatprep.subr.mxu0 0.0
    %720 = vmatpush2.msra.mxu0 %v645
    %721 = vmatprep.subr.mxu0 0.0
    %722 = vmatpush2.msra.mxu0 %v644
    %723 = vmatprep.subr.mxu0 0.0
    %724 = vmatpush2.msra.mxu0 %v643
    %725 = vmatprep.subr.mxu0 0.0
    %726 = vmatpush2.msra.mxu0 %v642
    %727 = vmatprep.subr.mxu0 0.0
    %728 = vmatpush2.msra.mxu0 %v641
    %729 = vmatprep.mubr.f32.mxu0 %v624
    %730 = vmatmul.mubr.f32.gmra.mxu0 %v623
    %v731 = vpop.f32.mrf.mxu0
    %v732 = vadd.f32 %v663, %v731
    %v733 = vpop.f32.mrf.mxu0
    %734 = vdwg.mxu0
    %735 = vst [vmem:[#allocation11] sm:$0xff] %v732
    // Predicated region
    $region50: #{tpu_custom_call.1} parent=1 // pred_check
      _
    $region51: #{tpu_custom_call.1} parent=1 // pred_check_branch
      %737 = sbr.rel (0) target = $region53
    $region52: #{tpu_custom_call.1} parent=1 // pred_region
      %s739 = ssub.s32 128, 128
      %740 = vsyncadd [#allocation4], %s739
      %s742 = sshll.u32 [#allocation11], 4
      %s743 = int_to_ptr.vmem [resolvable:$true] %s742
      %745 = dma.vmem_to_hbm [thread:$0]  %s743, 128, %s7, [#allocation4]
    $region53: #{tpu_custom_call.1} parent=1 // pred_fallthru
      _
    // Predicated region
    $region54: #{tpu_custom_call.1} parent=1 // pred_check
      _
    $region55: #{tpu_custom_call.1} parent=1 // pred_check_branch
      %747 = sbr.rel (0) target = $region57
    $region56: #{tpu_custom_call.1} parent=1 // pred_region
      %748 = dma.done [#allocation4], 128
    $region57: #{tpu_custom_call.1} parent=1 // pred_fallthru
      _
    %749 = vsyncpa [#allocation3], 1
    %750 = vsyncpa [#allocation6], 1
    %751 = vsyncpa [#allocation9], 1
    %752 = vsyncpa [#allocation4], 1

</llo_original>
